<compile_context>
chip_gen: v7x
topology: tpu7x:2x2x1
jax: 0.10.0
libtpu: 0.0.40
codegen_flags: <defaults>
</compile_context>

<pallas_src>
import functools

import jax
import jax.numpy as jnp
from jax.experimental import pallas as pl
from jax.experimental.pallas import tpu as pltpu  # noqa: F401  (TPU backend)

LANE = 128


def _round_up(v, m):
    return ((v + m - 1) // m) * m


def _recognition_kernel(x_ref, w1_ref, wh_ref, out_ref, *, mu_cols):
    """Single invocation, no grid: everything resident in VMEM.

    x_ref:  (B, D+1)        bf16, last column is 1.0 (folds fc1 bias)
    w1_ref: (D+1, H_TOT)    bf16, all nodes' fc1 side by side; row D is b1;
                            one hidden lane is the constant-one lane.
    wh_ref: (H_TOT, 2*HALF) bf16, block-diagonal fused [mu | logvar] heads;
                            the constant-one hidden row carries head biases.
    out_ref:(B, 2*HALF)     f32, [:, :HALF] = mu (packed per node),
                            [:, HALF:] = std = exp(0.5*logvar).
    """
    # fc1 for ALL nodes: one MXU matmul, f32 accumulation, f32 ReLU.
    h1 = jnp.maximum(
        jnp.dot(x_ref[...], w1_ref[...], preferred_element_type=jnp.float32),
        0.0)
    # Fused block-diagonal heads: one MXU matmul (bf16 in, f32 acc).
    head = jnp.dot(h1.astype(jnp.bfloat16), wh_ref[...],
                   preferred_element_type=jnp.float32)
    # Lane-aligned static split (mu_cols % 128 == 0): unmasked full-lane stores.
    out_ref[:, :mu_cols] = head[:, :mu_cols]
    out_ref[:, mu_cols:] = jnp.exp(0.5 * head[:, mu_cols:])


@functools.partial(jax.jit, static_argnames=("latent_dims",))
def recognition_models_forward(x, w1, wh, latent_dims):
    """Forward for all Recognition nodes. Returns (mu_list, std_list).

    Dense R = diag(std) is intentionally NOT materialized here (bandwidth
    hazard for large L); use dense_chol_from_std(std) at the point of use.
    """
    b, d = x.shape
    d_aug = w1.shape[0]                 # input_dim + 1
    h_tot = w1.shape[1]
    n_out = wh.shape[1]
    half = _round_up(sum(latent_dims), LANE)

    # Fold fc1 bias: append a ones column to x; cast MXU inputs to bf16.
    x_aug = jnp.zeros((b, d_aug), jnp.bfloat16)
    x_aug = x_aug.at[:, :d].set(x.astype(jnp.bfloat16))
    x_aug = x_aug.at[:, d].set(1.0)

    cost = pl.CostEstimate(
        flops=2 * b * (d_aug * h_tot + h_tot * n_out),
        transcendentals=b * half,
        bytes_accessed=2 * (x_aug.size + w1.size + wh.size) + 4 * b * n_out,
    )
    out = pl.pallas_call(
        functools.partial(_recognition_kernel, mu_cols=half),
        out_shape=jax.ShapeDtypeStruct((b, n_out), jnp.float32),
        cost_estimate=cost,
    )(x_aug, w1, wh)

    mu_list, std_list = [], []
    off = 0
    for lat in latent_dims:
        mu_list.append(out[:, off:off + lat])
        std_list.append(out[:, half + off:half + off + lat])
        off += lat
    return mu_list, std_list


def dense_chol_from_std(std):
    """R = diag(std) per batch element (diagonal Cholesky factor), on demand."""
    return std[:, :, None] * jnp.eye(std.shape[1], dtype=std.dtype)[None, :, :]


def init_params(key, input_dim, hidden_dim, latent_dim_list):
    """PyTorch nn.Linear-style uniform(+-1/sqrt(fan_in)) init, per node."""
    params = []
    for latent_dim in latent_dim_list:
        keys = jax.random.split(key, 7)
        key = keys[0]

        def lin(kw, kb, fan_in, fan_out):
            bound = 1.0 / jnp.sqrt(fan_in)
            w = jax.random.uniform(kw, (fan_out, fan_in), jnp.float32, -bound, bound)
            b = jax.random.uniform(kb, (fan_out,), jnp.float32, -bound, bound)
            # weight transposed to (in, out); bias as (1, out)
            return w.T, b[None, :]

        w1, b1 = lin(keys[1], keys[2], input_dim, hidden_dim)
        w21, b21 = lin(keys[3], keys[4], hidden_dim, latent_dim)
        # diagonal chol factor: free_parameter_size() == latent_dim
        w22, b22 = lin(keys[5], keys[6], hidden_dim, latent_dim)
        params.append(dict(w1=w1, b1=b1, w21=w21, b21=b21, w22=w22, b22=b22))
    return params


def pack_params(params, latent_dims, input_dim, hidden_dim):
    """Pack all nodes into one augmented fc1 matrix and one block-diag head.

    w1_packed: (input_dim+1, H_TOT)  row input_dim = fc1 biases;
               hidden lane `n*hidden_dim` is the constant-one lane.
    wh_packed: (H_TOT, 2*HALF)       columns [0, HALF) = mu blocks,
               [HALF, 2*HALF) = logvar blocks; the constant-one hidden row
               carries the head biases. HALF = round_up(sum(latent), 128).
    """
    n = len(latent_dims)
    total_lat = sum(latent_dims)
    half = _round_up(total_lat, LANE)
    d_aug = input_dim + 1
    ones_col = n * hidden_dim
    h_tot = _round_up(ones_col + 1, LANE)
    n_out = 2 * half

    w1 = jnp.zeros((d_aug, h_tot), jnp.float32)
    wh = jnp.zeros((h_tot, n_out), jnp.float32)
    off = 0
    for i, (p, lat) in enumerate(zip(params, latent_dims)):
        c0 = i * hidden_dim
        w1 = w1.at[:input_dim, c0:c0 + hidden_dim].set(p["w1"])
        w1 = w1.at[input_dim, c0:c0 + hidden_dim].set(p["b1"][0])
        # mu head block
        wh = wh.at[c0:c0 + hidden_dim, off:off + lat].set(p["w21"])
        wh = wh.at[ones_col, off:off + lat].set(p["b21"][0])
        # logvar head block
        v0 = half + off
        wh = wh.at[c0:c0 + hidden_dim, v0:v0 + lat].set(p["w22"])
        wh = wh.at[ones_col, v0:v0 + lat].set(p["b22"][0])
        off += lat
    # constant-one hidden lane: zero weights, bias 1 -> relu(1) == 1.
    w1 = w1.at[input_dim, ones_col].set(1.0)
    return dict(w1=w1.astype(jnp.bfloat16), wh=wh.astype(jnp.bfloat16))


def _reference_forward(x, params):
    """Pure-JAX f32 reference (per node, unfused) for correctness check."""
    mu_list, std_list = [], []
    for p in params:
        h1 = jnp.maximum(x @ p["w1"] + p["b1"], 0.0)
        mu = h1 @ p["w21"] + p["b21"]
        logvar = h1 @ p["w22"] + p["b22"]
        mu_list.append(mu)
        std_list.append(jnp.exp(0.5 * logvar))
    return mu_list, std_list


if __name__ == "__main__":
    # Small shapes consistent with the module's forward.
    batch = 8
    input_dim = 32
    hidden_dim = 32
    latent_dim_list = (8, 16, 32)

    root = jax.random.PRNGKey(0)
    k_x, k_p = jax.random.split(root)
    x = jax.random.normal(k_x, (batch, input_dim), jnp.float32)
    params = init_params(k_p, input_dim, hidden_dim, latent_dim_list)
    packed = pack_params(params, latent_dim_list, input_dim, hidden_dim)

    mu_list, std_list = recognition_models_forward(
        x, packed["w1"], packed["wh"], latent_dims=latent_dim_list)
    jax.block_until_ready(mu_list)
    jax.block_until_ready(std_list)

    # Sanity check against pure-JAX f32 reference (kernel uses bf16 MXU inputs,
    # f32 accumulation -> relaxed tolerance).
    mu_ref, std_ref = _reference_forward(x, params)
    for mu, std, mur, stdr in zip(mu_list, std_list, mu_ref, std_ref):
        assert jnp.allclose(mu, mur, atol=2e-2, rtol=2e-2)
        assert jnp.allclose(std, stdr, atol=2e-2, rtol=2e-2)
        # Dense R = diag(std) built lazily (outside the kernel) only where needed.
        r = dense_chol_from_std(std)
        rr = jax.vmap(jnp.diag)(stdr)
        assert jnp.allclose(r, rr, atol=2e-2, rtol=2e-2)

    print("KERNEL_OK")
</pallas_src>

<mosaic_0001>
module attributes {stable_mosaic.version = 11 : i64} {
  func.func @_recognition_kernel(%arg0: memref<8x33xbf16, #tpu.memory_space<vmem>>, %arg1: memref<33x128xbf16, #tpu.memory_space<vmem>>, %arg2: memref<128x256xbf16, #tpu.memory_space<vmem>>, %arg3: memref<8x256xf32, #tpu.memory_space<vmem>>) attributes {dimension_semantics = [], scalar_prefetch = 0 : i64, scratch_operands = 0 : i64, tpu.core_type = #tpu.core_type<tc>} {
    %c0 = arith.constant 0 : index
    %c0_0 = arith.constant 0 : index
    %0 = vector.load %arg0[%c0, %c0_0] : memref<8x33xbf16, #tpu.memory_space<vmem>>, vector<8x33xbf16>
    %c0_1 = arith.constant 0 : index
    %c0_2 = arith.constant 0 : index
    %1 = vector.load %arg1[%c0_1, %c0_2] : memref<33x128xbf16, #tpu.memory_space<vmem>>, vector<33x128xbf16>
    %cst = arith.constant dense<0.000000e+00> : vector<8x128xf32>
    %2 = tpu.matmul %0, %1, %cst {dimension_numbers = #tpu.dot_dimension_numbers<[1], [0], [0], [1], [0, 0, 1, 1], [], []>} : vector<8x33xbf16>, vector<33x128xbf16>, vector<8x128xf32> -> vector<8x128xf32>
    %cst_3 = arith.constant 0.000000e+00 : f32
    %3 = vector.broadcast %cst_3 : f32 to vector<8x128xf32>
    %4 = arith.maximumf %2, %3 : vector<8x128xf32>
    %5 = arith.truncf %4 : vector<8x128xf32> to vector<8x128xbf16>
    %c0_4 = arith.constant 0 : index
    %c0_5 = arith.constant 0 : index
    %6 = vector.load %arg2[%c0_4, %c0_5] : memref<128x256xbf16, #tpu.memory_space<vmem>>, vector<128x256xbf16>
    %cst_6 = arith.constant dense<0.000000e+00> : vector<8x256xf32>
    %7 = tpu.matmul %5, %6, %cst_6 {dimension_numbers = #tpu.dot_dimension_numbers<[1], [0], [0], [1], [0, 0, 1, 1], [], []>} : vector<8x128xbf16>, vector<128x256xbf16>, vector<8x256xf32> -> vector<8x256xf32>
    %8 = vector.extract_strided_slice %7 {offsets = [0, 0], sizes = [8, 128], strides = [1, 1]} : vector<8x256xf32> to vector<8x128xf32>
    %c0_7 = arith.constant 0 : index
    %c0_8 = arith.constant 0 : index
    %9 = vector.load %arg3[%c0_7, %c0_8] : memref<8x256xf32, #tpu.memory_space<vmem>>, vector<8x128xf32>
    tpu.vector_store %arg3[%c0_7, %c0_8], %8 {strides = array<i32>} : memref<8x256xf32, #tpu.memory_space<vmem>>, vector<8x128xf32>,
    %10 = vector.extract_strided_slice %7 {offsets = [0, 128], sizes = [8, 128], strides = [1, 1]} : vector<8x256xf32> to vector<8x128xf32>
    %cst_9 = arith.constant 5.000000e-01 : f32
    %11 = vector.broadcast %cst_9 : f32 to vector<8x128xf32>
    %12 = arith.mulf %11, %10 : vector<8x128xf32>
    %13 = math.exp %12 : vector<8x128xf32>
    %c0_10 = arith.constant 0 : index
    %c128 = arith.constant 128 : index
    %14 = vector.load %arg3[%c0_10, %c128] : memref<8x256xf32, #tpu.memory_space<vmem>>, vector<8x128xf32>
    tpu.vector_store %arg3[%c0_10, %c128], %13 {strides = array<i32>} : memref<8x256xf32, #tpu.memory_space<vmem>>, vector<8x128xf32>,
    return
  }
}

</mosaic_0001>

<llo_original>
// kernel: recognition_models_forward.1
$region0: #{recognition_models_forward.1}
  #allocation0 [shape = 'u32[]', space=smem, size = 0x4, offset = 0x4, fixed_abs, tag = 'smem constant byte address 0x4 - core index']
  #allocation1 [shape = 'u32[144,128]{1,0:T(1,128)}', space=vmem, size = 0x12000, scoped, tag = 'internal scratch']
  %s0 = inlined_call_operand.vmem [shape: bf16[8,33], index: 0, kind: input, shape index: {}]
  %s1 = inlined_call_operand.vmem [shape: bf16[33,128], index: 1, kind: input, shape index: {}]
  %s2 = inlined_call_operand.hbm [shape: bf16[128,256], index: 2, kind: input, shape index: {}]
  %s3 = inlined_call_operand.vmem [shape: f32[8,256], index: 3, kind: output, shape index: {}]
  %s4 = sld [smem:[#allocation0]]
  $region26: #{recognition_models_forward.1} parent=0
    _
  %s6 = ssub.s32 1, %s4
  %s7 = scalar_select 0, %s6, %s4
  $region1: #{recognition_models_forward.1} parent=0
    #allocation2 [shape = 'u8[65536]{0}', space=vmem, size = 0x10000, scoped, tag = 'input window, operand 2, single buffered']
    #allocation3 [shape = 's32[1]{0}', space=sflag, size = 0x4, scoped, tag = 'scoped memory for recognition_models_forward.1']
    %8 = vsyncpa [#allocation3], 0
    // Predicated region
    $region2: #{recognition_models_forward.1} parent=1 // pred_check
      _
    $region3: #{recognition_models_forward.1} parent=1 // pred_check_branch
      %10 = sbr.rel (0) target = $region5
    $region4: #{recognition_models_forward.1} parent=1 // pred_region
      _
    $region5: #{recognition_models_forward.1} parent=1 // pred_fallthru
      _
    // Predicated region
    $region6: #{recognition_models_forward.1} parent=1 // pred_check
      _
    $region7: #{recognition_models_forward.1} parent=1 // pred_check_branch
      %12 = sbr.rel (0) target = $region9
    $region8: #{recognition_models_forward.1} parent=1 // pred_region
      _
    $region9: #{recognition_models_forward.1} parent=1 // pred_fallthru
      _
    // Predicated region
    $region10: #{recognition_models_forward.1} parent=1 // pred_check
      _
    $region11: #{recognition_models_forward.1} parent=1 // pred_check_branch
      %14 = sbr.rel (0) target = $region13
    $region12: #{recognition_models_forward.1} parent=1 // pred_region
      %s16 = ssub.s32 2048, 2048
      %17 = vsyncadd [#allocation3], %s16
      %s18 = sshll.u32 [#allocation2], 4
      %s19 = int_to_ptr.vmem [resolvable:$true] %s18
      %24 = dma.hbm_to_vmem [thread:$0]  %s2, 2048, %s19, [#allocation3], 128, 128, 8
    $region13: #{recognition_models_forward.1} parent=1 // pred_fallthru
      _
    // Predicated region
    $region14: #{recognition_models_forward.1} parent=1 // pred_check
      _
    $region15: #{recognition_models_forward.1} parent=1 // pred_check_branch
      %26 = sbr.rel (0) target = $region17
    $region16: #{recognition_models_forward.1} parent=1 // pred_region
      %27 = dma.done [#allocation3], 2048
    $region17: #{recognition_models_forward.1} parent=1 // pred_fallthru
      _
    %v29 = vld [vmem:[%s0] sm:$0xf]
    %v30 = vld [vmem:[%s1] sm:$0xf]
    %v31 = vld [vmem:[%s1 + $0x4] sm:$0xf]
    %v32 = vld [vmem:[%s1 + $0x8] sm:$0xf]
    %v33 = vld [vmem:[%s1 + $0xc] sm:$0xf]
    %v34 = vld [vmem:[%s1 + $0x10] sm:$0x1]
    %v40 = vunpack.c.l.b16 %v30
    %v41 = vunpack.c.l.b16 %v31
    %v42 = vunpack.c.l.b16 %v32
    %v43 = vunpack.c.l.b16 %v33
    %v44 = vunpack.c.l.b16 %v34
    %v45 = vpack.c.b16 %v41, %v40
    %v46 = vpack.c.b16 %v43, %v42
    %v47 = vpack.c.b16 %v44, %v44
    %vm50 = vcmask 269312
    %v52 = vsel %vm50, %v29, 0
    %vm54 = vcmask 1040384
    %v55 = vsel 0, 4294967295, 65535
    %v56 = vsel %vm54, %v55, 0
    %v58 = vand.u32 %v47, %v56
    %60 = vmatprep.subr.bf16.mxu0 0
    %61 = vmatpush1.bf16.msra.mxu0 %v45
    %62 = vmatprep.subr.bf16.mxu0 0
    %63 = vmatpush1.bf16.msra.mxu0 %v46
    %64 = vmatprep.subr.bf16.mxu0 0
    %65 = vmatpush1.bf16.msra.mxu0 %v58
    %66 = vmatprep.subr.bf16.mxu0 0
    %67 = vmatpush1.bf16.msra.mxu0 0
    %68 = vmatprep.subr.bf16.mxu0 0
    %69 = vmatpush1.bf16.msra.mxu0 0
    %70 = vmatprep.subr.bf16.mxu0 0
    %71 = vmatpush1.bf16.msra.mxu0 0
    %72 = vmatprep.subr.bf16.mxu0 0
    %73 = vmatpush1.bf16.msra.mxu0 0
    %74 = vmatprep.subr.bf16.mxu0 0
    %75 = vmatpush1.bf16.msra.mxu0 0
    %76 = vmatprep.subr.bf16.mxu0 0
    %77 = vmatpush1.bf16.msra.mxu0 0
    %78 = vmatprep.subr.bf16.mxu0 0
    %79 = vmatpush1.bf16.msra.mxu0 0
    %80 = vmatprep.subr.bf16.mxu0 0
    %81 = vmatpush1.bf16.msra.mxu0 0
    %82 = vmatprep.subr.bf16.mxu0 0
    %83 = vmatpush1.bf16.msra.mxu0 0
    %84 = vmatprep.subr.bf16.mxu0 0
    %85 = vmatpush1.bf16.msra.mxu0 0
    %86 = vmatprep.subr.bf16.mxu0 0
    %87 = vmatpush1.bf16.msra.mxu0 0
    %88 = vmatprep.subr.bf16.mxu0 0
    %89 = vmatpush1.bf16.msra.mxu0 0
    %90 = vmatprep.subr.bf16.mxu0 0
    %91 = vmatpush1.bf16.msra.mxu0 0
    %92 = vmatprep.mubr.bf16.mxu0 0
    %93 = vmatmul.mubr.bf16.gmra.mrb[0].mxu0 %v52
    %v94 = vpop.f32.mrb[0].mxu0
    %v95 = vadd.f32 0.0, %v94
    %v96 = vpop.f32.mrb[0].mxu0
    %v97 = vpop.f32.mrb[0].mxu0
    %v98 = vpop.f32.mrb[0].mxu0
    %99 = vdwg.mxu0
    %v100 = vmax.f32 %v95, 0.0
    %v101 = vpack.c.bf16 %v100, %v100
    %v102 = vld [vmem:[#allocation2] sm:$0xff]
    %v103 = vld [vmem:[#allocation2 + $0x8] sm:$0xff]
    %v104 = vld [vmem:[#allocation2 + $0x10] sm:$0xff]
    %v105 = vld [vmem:[#allocation2 + $0x18] sm:$0xff]
    %v106 = vld [vmem:[#allocation2 + $0x20] sm:$0xff]
    %v107 = vld [vmem:[#allocation2 + $0x28] sm:$0xff]
    %v108 = vld [vmem:[#allocation2 + $0x30] sm:$0xff]
    %v109 = vld [vmem:[#allocation2 + $0x38] sm:$0xff]
    %v110 = vld [vmem:[#allocation2 + $0x40] sm:$0xff]
    %v111 = vld [vmem:[#allocation2 + $0x48] sm:$0xff]
    %v112 = vld [vmem:[#allocation2 + $0x50] sm:$0xff]
    %v113 = vld [vmem:[#allocation2 + $0x58] sm:$0xff]
    %v114 = vld [vmem:[#allocation2 + $0x60] sm:$0xff]
    %v115 = vld [vmem:[#allocation2 + $0x68] sm:$0xff]
    %v116 = vld [vmem:[#allocation2 + $0x70] sm:$0xff]
    %v117 = vld [vmem:[#allocation2 + $0x78] sm:$0xff]
    %v134 = vunpack.c.l.b16 %v102
    %v135 = vunpack.c.h.b16 %v102
    %v136 = vunpack.c.l.b16 %v103
    %v137 = vunpack.c.h.b16 %v103
    %v138 = vunpack.c.l.b16 %v104
    %v139 = vunpack.c.h.b16 %v104
    %v140 = vunpack.c.l.b16 %v105
    %v141 = vunpack.c.h.b16 %v105
    %v142 = vunpack.c.l.b16 %v106
    %v143 = vunpack.c.h.b16 %v106
    %v144 = vunpack.c.l.b16 %v107
    %v145 = vunpack.c.h.b16 %v107
    %v146 = vunpack.c.l.b16 %v108
    %v147 = vunpack.c.h.b16 %v108
    %v148 = vunpack.c.l.b16 %v109
    %v149 = vunpack.c.h.b16 %v109
    %v150 = vunpack.c.l.b16 %v110
    %v151 = vunpack.c.h.b16 %v110
    %v152 = vunpack.c.l.b16 %v111
    %v153 = vunpack.c.h.b16 %v111
    %v154 = vunpack.c.l.b16 %v112
    %v155 = vunpack.c.h.b16 %v112
    %v156 = vunpack.c.l.b16 %v113
    %v157 = vunpack.c.h.b16 %v113
    %v158 = vunpack.c.l.b16 %v114
    %v159 = vunpack.c.h.b16 %v114
    %v160 = vunpack.c.l.b16 %v115
    %v161 = vunpack.c.h.b16 %v115
    %v162 = vunpack.c.l.b16 %v116
    %v163 = vunpack.c.h.b16 %v116
    %v164 = vunpack.c.l.b16 %v117
    %v165 = vunpack.c.h.b16 %v117
    %v166 = vpack.c.b16 %v136, %v134
    %v167 = vpack.c.b16 %v137, %v135
    %v168 = vpack.c.b16 %v140, %v138
    %v169 = vpack.c.b16 %v141, %v139
    %v170 = vpack.c.b16 %v144, %v142
    %v171 = vpack.c.b16 %v145, %v143
    %v172 = vpack.c.b16 %v148, %v146
    %v173 = vpack.c.b16 %v149, %v147
    %v174 = vpack.c.b16 %v152, %v150
    %v175 = vpack.c.b16 %v153, %v151
    %v176 = vpack.c.b16 %v156, %v154
    %v177 = vpack.c.b16 %v157, %v155
    %v178 = vpack.c.b16 %v160, %v158
    %v179 = vpack.c.b16 %v161, %v159
    %v180 = vpack.c.b16 %v164, %v162
    %v181 = vpack.c.b16 %v165, %v163
    %198 = vmatprep.subr.bf16.mxu0 %v167
    %199 = vmatpush1.bf16.msra.mxu0 %v166
    %200 = vmatprep.subr.bf16.mxu0 %v169
    %201 = vmatpush1.bf16.msra.mxu0 %v168
    %202 = vmatprep.subr.bf16.mxu0 %v171
    %203 = vmatpush1.bf16.msra.mxu0 %v170
    %204 = vmatprep.subr.bf16.mxu0 %v173
    %205 = vmatpush1.bf16.msra.mxu0 %v172
    %206 = vmatprep.subr.bf16.mxu0 %v175
    %207 = vmatpush1.bf16.msra.mxu0 %v174
    %208 = vmatprep.subr.bf16.mxu0 %v177
    %209 = vmatpush1.bf16.msra.mxu0 %v176
    %210 = vmatprep.subr.bf16.mxu0 %v179
    %211 = vmatpush1.bf16.msra.mxu0 %v178
    %212 = vmatprep.subr.bf16.mxu0 %v181
    %213 = vmatpush1.bf16.msra.mxu0 %v180
    %214 = vmatprep.subr.bf16.mxu0 0
    %215 = vmatpush1.bf16.msra.mxu0 0
    %216 = vmatprep.subr.bf16.mxu0 0
    %217 = vmatpush1.bf16.msra.mxu0 0
    %218 = vmatprep.subr.bf16.mxu0 0
    %219 = vmatpush1.bf16.msra.mxu0 0
    %220 = vmatprep.subr.bf16.mxu0 0
    %221 = vmatpush1.bf16.msra.mxu0 0
    %222 = vmatprep.subr.bf16.mxu0 0
    %223 = vmatpush1.bf16.msra.mxu0 0
    %224 = vmatprep.subr.bf16.mxu0 0
    %225 = vmatpush1.bf16.msra.mxu0 0
    %226 = vmatprep.subr.bf16.mxu0 0
    %227 = vmatpush1.bf16.msra.mxu0 0
    %228 = vmatprep.subr.bf16.mxu0 0
    %229 = vmatpush1.bf16.msra.mxu0 0
    %230 = vmatprep.mubr.bf16.mxu0 0
    %231 = vmatmul.mubr.bf16.gmra.mrb[0].mxu0 %v101
    %v232 = vpop.f32.mrb[0].mxu0
    %v233 = vadd.f32 0.0, %v232
    %v234 = vpop.f32.mrb[0].mxu0
    %v235 = vadd.f32 0.0, %v234
    %v236 = vpop.f32.mrb[0].mxu0
    %v237 = vpop.f32.mrb[0].mxu0
    %238 = vdwg.mxu0
    %239 = vst [vmem:[%s3] sm:$0xff] %v233
    %v240 = vmul.f32 %v235, 0.5
    %v241 = vmul.f32 %v240, 1.442695
    %v242 = vpow.pop %v241
    %243 = vst [vmem:[%s3 + $0x8] sm:$0xff] %v242
    // Predicated region
    $region18: #{recognition_models_forward.1} parent=1 // pred_check
      _
    $region19: #{recognition_models_forward.1} parent=1 // pred_check_branch
      %245 = sbr.rel (0) target = $region21
    $region20: #{recognition_models_forward.1} parent=1 // pred_region
      _
    $region21: #{recognition_models_forward.1} parent=1 // pred_fallthru
      _
    // Predicated region
    $region22: #{recognition_models_forward.1} parent=1 // pred_check
      _
    $region23: #{recognition_models_forward.1} parent=1 // pred_check_branch
      %247 = sbr.rel (0) target = $region25
    $region24: #{recognition_models_forward.1} parent=1 // pred_region
      _
    $region25: #{recognition_models_forward.1} parent=1 // pred_fallthru
      _
    %248 = vsyncpa [#allocation3], 1

</llo_original>
